<compile_context>
chip_gen: v7x
topology: tpu7x:2x2x1
jax: 0.10.0
libtpu: 0.0.40
codegen_flags: <defaults>
</compile_context>

<pallas_src>
import numpy as np
import jax
import jax.numpy as jnp
from jax.experimental import pallas as pl
from jax.experimental.pallas import tpu as pltpu


def _make_time_basis(size: int, polynomial_size: int) -> np.ndarray:
    # np.power(np.arange(size)/size, i) stacked over i = 0..degree  -> (P, T)
    t = np.arange(size, dtype=np.float64) / size
    rows = [np.power(t, i)[None, :] for i in range(polynomial_size)]
    return np.concatenate(rows, axis=0).astype(np.float32)


def _trend_basis_fused_kernel(theta_ref, basis_ref, out_ref):
    # theta_ref: (TB, 2P), basis_ref: (2P, Tf+Tb), out_ref: (TB, Tf+Tb).
    # Single fused matmul on the MXU; no in-kernel lane slicing.
    out_ref[...] = jnp.dot(theta_ref[...], basis_ref[...],
                           preferred_element_type=jnp.float32)


def _build_blockdiag_basis(forecast_time: jax.Array,
                           backcast_time: jax.Array) -> jax.Array:
    # [[forecast_time, 0], [0, backcast_time]]  -> (2P, Tf+Tb), built once in
    # the wrapper (constant, folded by XLA).
    P, Tf = forecast_time.shape
    _, Tb = backcast_time.shape
    basis = jnp.zeros((2 * P, Tf + Tb), dtype=jnp.float32)
    basis = basis.at[:P, :Tf].set(forecast_time.astype(jnp.float32))
    basis = basis.at[P:, Tf:].set(backcast_time.astype(jnp.float32))
    return basis


def trend_basis_forward(theta: jax.Array,
                        backcast_time: jax.Array,
                        forecast_time: jax.Array,
                        *,
                        block_b: int = 512):
    """theta: (B, 2P) f32; backcast_time: (P, Tb); forecast_time: (P, Tf).
    Returns (backcast (B, Tb), forecast (B, Tf))."""
    B, twoP = theta.shape
    P, Tb = backcast_time.shape
    P2, Tf = forecast_time.shape
    assert twoP == 2 * P and P2 == P
    T_total = Tf + Tb

    basis = _build_blockdiag_basis(forecast_time, backcast_time)

    # Batch block: full B when small (block == full dim satisfies the (8,128)
    # rule), otherwise a multiple-of-8 tile so large B pipelines over a
    # "parallel" grid axis (megacore on v7x).
    tb = B if B <= block_b else block_b
    grid = (pl.cdiv(B, tb),)

    out = pl.pallas_call(
        _trend_basis_fused_kernel,
        out_shape=jax.ShapeDtypeStruct((B, T_total), jnp.float32),
        grid_spec=pltpu.PrefetchScalarGridSpec(
            num_scalar_prefetch=0,
            grid=grid,
            in_specs=[
                pl.BlockSpec((tb, 2 * P), lambda i: (i, 0)),       # theta tile
                pl.BlockSpec((2 * P, T_total), lambda i: (0, 0)),  # basis, VMEM-resident
            ],
            out_specs=pl.BlockSpec((tb, T_total), lambda i: (i, 0)),
        ),
        compiler_params=pltpu.CompilerParams(
            dimension_semantics=("parallel",)),
    )(theta.astype(jnp.float32), basis)

    # Free XLA slices in HBM (no in-kernel lane-offset slicing).
    forecast = out[:, :Tf]
    backcast = out[:, Tf:]
    return backcast, forecast


if __name__ == "__main__":
    # Module config (small, deterministic)
    degree_of_polynomial = 3
    polynomial_size = degree_of_polynomial + 1   # P = 4
    backcast_size = 16
    forecast_size = 8
    batch = 2

    # Deterministic non-trainable basis parameters (same as __init__)
    backcast_time = jnp.asarray(_make_time_basis(backcast_size, polynomial_size))
    forecast_time = jnp.asarray(_make_time_basis(forecast_size, polynomial_size))

    # Deterministic input theta: (B, 2*P); forecast coeffs first, backcast last.
    key = jax.random.PRNGKey(0)
    theta = jax.random.normal(key, (batch, 2 * polynomial_size), dtype=jnp.float32)

    backcast, forecast = trend_basis_forward(theta, backcast_time, forecast_time)
    jax.block_until_ready((backcast, forecast))

    # Reference check in plain JAX (einsum semantics of the PyTorch forward)
    theta_fore = theta[:, :polynomial_size]
    theta_back = theta[:, polynomial_size:]
    ref_back = jnp.einsum("bp,pt->bt", theta_back, backcast_time)
    ref_fore = jnp.einsum("bp,pt->bt", theta_fore, forecast_time)
    assert backcast.shape == (batch, backcast_size)
    assert forecast.shape == (batch, forecast_size)
    np.testing.assert_allclose(np.asarray(backcast), np.asarray(ref_back),
                               rtol=1e-5, atol=1e-5)
    np.testing.assert_allclose(np.asarray(forecast), np.asarray(ref_fore),
                               rtol=1e-5, atol=1e-5)
    print("KERNEL_OK")
</pallas_src>

<mosaic_0001>
module attributes {stable_mosaic.version = 11 : i64} {
  func.func @_trend_basis_fused_kernel(%arg0: i32, %arg1: memref<2x8xf32, #tpu.memory_space<vmem>>, %arg2: memref<8x24xf32, #tpu.memory_space<vmem>>, %arg3: memref<2x24xf32, #tpu.memory_space<vmem>>) attributes {dimension_semantics = [#tpu.dimension_semantics<parallel>], iteration_bounds = array<i64: 1>, scalar_prefetch = 0 : i64, scratch_operands = 0 : i64, tpu.core_type = #tpu.core_type<tc>, window_params = [{transform_indices = @transform_0, window_bounds = array<i64: 2, 8>}, {pipeline_mode = #tpu.pipeline_mode<synchronous>, transform_indices = @transform_1, window_bounds = array<i64: 8, 24>}, {transform_indices = @transform_2, window_bounds = array<i64: 2, 24>}]} {
    %c0 = arith.constant 0 : index
    %c0_0 = arith.constant 0 : index
    %0 = vector.load %arg1[%c0, %c0_0] : memref<2x8xf32, #tpu.memory_space<vmem>>, vector<2x8xf32>
    %c0_1 = arith.constant 0 : index
    %c0_2 = arith.constant 0 : index
    %1 = vector.load %arg2[%c0_1, %c0_2] : memref<8x24xf32, #tpu.memory_space<vmem>>, vector<8x24xf32>
    %cst = arith.constant dense<0.000000e+00> : vector<2x24xf32>
    %2 = tpu.matmul %0, %1, %cst {dimension_numbers = #tpu.dot_dimension_numbers<[1], [0], [0], [1], [0, 0, 1, 1], [], []>} : vector<2x8xf32>, vector<8x24xf32>, vector<2x24xf32> -> vector<2x24xf32>
    %c0_3 = arith.constant 0 : index
    %c0_4 = arith.constant 0 : index
    %3 = vector.load %arg3[%c0_3, %c0_4] : memref<2x24xf32, #tpu.memory_space<vmem>>, vector<2x24xf32>
    tpu.vector_store %arg3[%c0_3, %c0_4], %2 {strides = array<i32>} : memref<2x24xf32, #tpu.memory_space<vmem>>, vector<2x24xf32>,
    return
  }
  func.func @transform_0(%arg0: i32) -> (i32, i32) {
    %c0_i32 = arith.constant 0 : i32
    %c0_i32_0 = arith.constant 0 : i32
    return %arg0, %c0_i32 : i32, i32
  }
  func.func @transform_1(%arg0: i32) -> (i32, i32) {
    %c0_i32 = arith.constant 0 : i32
    %c0_i32_0 = arith.constant 0 : i32
    %c0_i32_1 = arith.constant 0 : i32
    return %c0_i32, %c0_i32_0 : i32, i32
  }
  func.func @transform_2(%arg0: i32) -> (i32, i32) {
    %c0_i32 = arith.constant 0 : i32
    %c0_i32_0 = arith.constant 0 : i32
    return %arg0, %c0_i32 : i32, i32
  }
}

</mosaic_0001>

<llo_original>
// kernel: tpu_custom_call.1
$region0: #{tpu_custom_call.1}
  #allocation0 [shape = 'u32[]', space=smem, size = 0x4, offset = 0x4, fixed_abs, tag = 'smem constant byte address 0x4 - core index']
  #allocation1 [shape = 'u32[144,128]{1,0:T(1,128)}', space=vmem, size = 0x12000, scoped, tag = 'internal scratch']
  %s0 = inlined_call_operand.hbm [shape: f32[2,8], index: 0, kind: input, shape index: {}]
  %s1 = inlined_call_operand.hbm [shape: f32[8,24], index: 1, kind: input, shape index: {}]
  %s2 = inlined_call_operand.hbm [shape: f32[2,24], index: 2, kind: output, shape index: {}]
  %s3 = sld [smem:[#allocation0]]
  $region26: #{tpu_custom_call.1} parent=0
    _
  %s5 = ssub.s32 1, %s3
  %s6 = scalar_select 0, %s5, %s3
  $region1: #{tpu_custom_call.1} parent=0
    #allocation2 [shape = 'u8[1024]{0}', space=vmem, size = 0x400, scoped, tag = 'input window, operand 0, single buffered']
    #allocation3 [shape = 's32[1]{0}', space=sflag, size = 0x4, scoped, tag = 'scoped memory for tpu_custom_call.1']
    #allocation4 [shape = 's32[1]{0}', space=sflag, size = 0x4, scoped, tag = 'scoped memory for tpu_custom_call.1']
    #allocation5 [shape = 'u8[4096]{0}', space=vmem, size = 0x1000, scoped, tag = 'input window, operand 1, single buffered']
    #allocation6 [shape = 's32[1]{0}', space=sflag, size = 0x4, scoped, tag = 'scoped memory for tpu_custom_call.1']
    #allocation7 [shape = 'u8[1024]{0}', space=vmem, size = 0x400, scoped, tag = 'output window, operand 0, single buffered']
    %7 = vsyncpa [#allocation3], 0
    %8 = vsyncpa [#allocation6], 0
    %9 = vsyncpa [#allocation4], 0
    // Predicated region
    $region2: #{tpu_custom_call.1} parent=1 // pred_check
      _
    $region3: #{tpu_custom_call.1} parent=1 // pred_check_branch
      %11 = sbr.rel (0) target = $region5
    $region4: #{tpu_custom_call.1} parent=1 // pred_region
      %s13 = ssub.s32 32, 32
      %14 = vsyncadd [#allocation3], %s13
      %s16 = sshll.u32 [#allocation2], 4
      %s17 = int_to_ptr.vmem [resolvable:$true] %s16
      %19 = dma.hbm_to_vmem [thread:$0]  %s0, 32, %s17, [#allocation3]
    $region5: #{tpu_custom_call.1} parent=1 // pred_fallthru
      _
    // Predicated region
    $region6: #{tpu_custom_call.1} parent=1 // pred_check
      _
    $region7: #{tpu_custom_call.1} parent=1 // pred_check_branch
      %21 = sbr.rel (0) target = $region9
    $region8: #{tpu_custom_call.1} parent=1 // pred_region
      %s23 = ssub.s32 128, 128
      %24 = vsyncadd [#allocation6], %s23
      %s26 = sshll.u32 [#allocation5], 4
      %s27 = int_to_ptr.vmem [resolvable:$true] %s26
      %29 = dma.hbm_to_vmem [thread:$0]  %s1, 128, %s27, [#allocation6]
    $region9: #{tpu_custom_call.1} parent=1 // pred_fallthru
      _
    // Predicated region
    $region10: #{tpu_custom_call.1} parent=1 // pred_check
      _
    $region11: #{tpu_custom_call.1} parent=1 // pred_check_branch
      %31 = sbr.rel (0) target = $region13
    $region12: #{tpu_custom_call.1} parent=1 // pred_region
      %32 = dma.done [#allocation3], 32
    $region13: #{tpu_custom_call.1} parent=1 // pred_fallthru
      _
    // Predicated region
    $region14: #{tpu_custom_call.1} parent=1 // pred_check
      _
    $region15: #{tpu_custom_call.1} parent=1 // pred_check_branch
      %34 = sbr.rel (0) target = $region17
    $region16: #{tpu_custom_call.1} parent=1 // pred_region
      %35 = dma.done [#allocation6], 128
    $region17: #{tpu_custom_call.1} parent=1 // pred_fallthru
      _
    %v36 = vld [vmem:[#allocation2] sm:$0x3]
    %v37 = vld [vmem:[#allocation5] sm:$0xff]
    %vm38 = vcmask 64512
    %v40 = vsel %vm38, %v36, 0
    %42 = vmatprep.subr.mxu0 0.0
    %43 = vmatpush1.msra.mxu0 %v37
    %44 = vmatprep.subr.mxu0 0.0
    %45 = vmatpush1.msra.mxu0 0.0
    %46 = vmatprep.subr.mxu0 0.0
    %47 = vmatpush1.msra.mxu0 0.0
    %48 = vmatprep.subr.mxu0 0.0
    %49 = vmatpush1.msra.mxu0 0.0
    %50 = vmatprep.subr.mxu0 0.0
    %51 = vmatpush1.msra.mxu0 0.0
    %52 = vmatprep.subr.mxu0 0.0
    %53 = vmatpush1.msra.mxu0 0.0
    %54 = vmatprep.subr.mxu0 0.0
    %55 = vmatpush1.msra.mxu0 0.0
    %56 = vmatprep.subr.mxu0 0.0
    %57 = vmatpush1.msra.mxu0 0.0
    %58 = vmatprep.subr.mxu0 0.0
    %59 = vmatpush1.msra.mxu0 0.0
    %60 = vmatprep.subr.mxu0 0.0
    %61 = vmatpush1.msra.mxu0 0.0
    %62 = vmatprep.subr.mxu0 0.0
    %63 = vmatpush1.msra.mxu0 0.0
    %64 = vmatprep.subr.mxu0 0.0
    %65 = vmatpush1.msra.mxu0 0.0
    %66 = vmatprep.subr.mxu0 0.0
    %67 = vmatpush1.msra.mxu0 0.0
    %68 = vmatprep.subr.mxu0 0.0
    %69 = vmatpush1.msra.mxu0 0.0
    %70 = vmatprep.subr.mxu0 0.0
    %71 = vmatpush1.msra.mxu0 0.0
    %72 = vmatprep.subr.mxu0 0.0
    %73 = vmatpush1.msra.mxu0 0.0
    %74 = vmatprep.subr.mxu0 0.0
    %75 = vmatpush1.msra.mxu0 0.0
    %76 = vmatprep.subr.mxu0 0.0
    %77 = vmatpush1.msra.mxu0 0.0
    %78 = vmatprep.subr.mxu0 0.0
    %79 = vmatpush1.msra.mxu0 0.0
    %80 = vmatprep.subr.mxu0 0.0
    %81 = vmatpush1.msra.mxu0 0.0
    %82 = vmatprep.subr.mxu0 0.0
    %83 = vmatpush1.msra.mxu0 0.0
    %84 = vmatprep.subr.mxu0 0.0
    %85 = vmatpush1.msra.mxu0 0.0
    %86 = vmatprep.subr.mxu0 0.0
    %87 = vmatpush1.msra.mxu0 0.0
    %88 = vmatprep.subr.mxu0 0.0
    %89 = vmatpush1.msra.mxu0 0.0
    %90 = vmatprep.subr.mxu0 0.0
    %91 = vmatpush1.msra.mxu0 0.0
    %92 = vmatprep.subr.mxu0 0.0
    %93 = vmatpush1.msra.mxu0 0.0
    %94 = vmatprep.subr.mxu0 0.0
    %95 = vmatpush1.msra.mxu0 0.0
    %96 = vmatprep.subr.mxu0 0.0
    %97 = vmatpush1.msra.mxu0 0.0
    %98 = vmatprep.subr.mxu0 0.0
    %99 = vmatpush1.msra.mxu0 0.0
    %100 = vmatprep.subr.mxu0 0.0
    %101 = vmatpush1.msra.mxu0 0.0
    %102 = vmatprep.subr.mxu0 0.0
    %103 = vmatpush1.msra.mxu0 0.0
    %104 = vmatprep.subr.mxu0 0.0
    %105 = vmatpush1.msra.mxu0 0.0
    %106 = vmatprep.mubr.f32.mxu0 0.0
    %107 = vmatmul.mubr.f32.gmra.mrb[0].mxu0 %v40
    %v108 = vpop.f32.mrb[0].mxu0
    %v109 = vadd.f32 0.0, %v108
    %v110 = vpop.f32.mrb[0].mxu0
    %111 = vdwg.mxu0
    %vm112 = vcmask 189440
    %113 = vst.msk [vmem:[#allocation7] sm:$0x3] %vm112, %v109
    // Predicated region
    $region18: #{tpu_custom_call.1} parent=1 // pred_check
      _
    $region19: #{tpu_custom_call.1} parent=1 // pred_check_branch
      %115 = sbr.rel (0) target = $region21
    $region20: #{tpu_custom_call.1} parent=1 // pred_region
      %s117 = ssub.s32 32, 32
      %118 = vsyncadd [#allocation4], %s117
      %s120 = sshll.u32 [#allocation7], 4
      %s121 = int_to_ptr.vmem [resolvable:$true] %s120
      %123 = dma.vmem_to_hbm [thread:$0]  %s121, 32, %s2, [#allocation4]
    $region21: #{tpu_custom_call.1} parent=1 // pred_fallthru
      _
    // Predicated region
    $region22: #{tpu_custom_call.1} parent=1 // pred_check
      _
    $region23: #{tpu_custom_call.1} parent=1 // pred_check_branch
      %125 = sbr.rel (0) target = $region25
    $region24: #{tpu_custom_call.1} parent=1 // pred_region
      %126 = dma.done [#allocation4], 32
    $region25: #{tpu_custom_call.1} parent=1 // pred_fallthru
      _
    %127 = vsyncpa [#allocation3], 1
    %128 = vsyncpa [#allocation6], 1
    %129 = vsyncpa [#allocation4], 1

</llo_original>
